<compile_context>
chip_gen: v7x
topology: tpu7x:2x2x1
jax: 0.10.0
libtpu: 0.0.40
codegen_flags: <defaults>
</compile_context>

<pallas_src>
import functools

import jax
import jax.numpy as jnp
from jax.experimental import pallas as pl
from jax.experimental.pallas import tpu as pltpu

EPS = 1e-5


def _choose_tile_rows(num_rows, num_lanes, target_bytes=2 << 20):
    """Largest row tile (~target_bytes of f32) obeying the (8, lane) tiling rules."""
    t = max(1, target_bytes // (num_lanes * 4))
    if t >= num_rows:
        return num_rows                       # full extent is always legal
    t = max(8, (t // 8) * 8)                  # sublane-aligned partial tile
    return num_rows if t >= num_rows else t


# ----------------------------------------------------------------------------
# Pass 1: per-(n, c)-row sum and sum-of-squares over the H*W lane axis.
# Each grid step owns its own output rows -> no cross-step accumulation, so
# the grid axis is fully "parallel" (on v7x both TensorCores stream HBM).
# ----------------------------------------------------------------------------
def _stats_kernel(x_ref, out_ref, *, total_rows, tile_rows):
    x = x_ref[...]                                          # (TM, L) f32
    if total_rows % tile_rows != 0:
        row = (jax.lax.broadcasted_iota(jnp.int32, x.shape, 0)
               + pl.program_id(0) * tile_rows)
        x = jnp.where(row < total_rows, x, 0.0)             # exclude padded rows
    s = jnp.sum(x, axis=1, keepdims=True)                   # (TM, 1)
    ss = jnp.sum(x * x, axis=1, keepdims=True)              # (TM, 1)
    out_ref[...] = jnp.concatenate([s, ss], axis=1)         # (TM, 2)


# ----------------------------------------------------------------------------
# Pass 2: fused y = max(x * scale_row + shift_row, 0), lane-dense stores.
# ----------------------------------------------------------------------------
def _bn_relu_kernel(x_ref, scale_ref, shift_ref, o_ref):
    y = x_ref[...] * scale_ref[...] + shift_ref[...]        # (TM,L) * (TM,1)
    o_ref[...] = jnp.maximum(y, 0.0).astype(o_ref.dtype)


def batchnorm_relu(x_nchw, gamma, beta, *, eps=EPS):
    """nn.BatchNorm2d (training forward, batch stats, biased var) + ReLU."""
    n, c, h, w = x_nchw.shape
    rows, lanes = n * c, h * w

    x2d = x_nchw.reshape(rows, lanes).astype(jnp.float32)   # view, no copy

    tile_rows = _choose_tile_rows(rows, lanes)
    grid = (pl.cdiv(rows, tile_rows),)

    # Scoped VMEM: double-buffered (input + output) f32 tiles + slack.
    tile_bytes = tile_rows * lanes * 4
    vmem_limit = int(min(max(4 * tile_bytes + (2 << 20), 16 << 20), 48 << 20))
    cparams = pltpu.CompilerParams(
        dimension_semantics=("parallel",), vmem_limit_bytes=vmem_limit)

    # ---- pass 1: per-row statistics ----
    stats = pl.pallas_call(
        functools.partial(_stats_kernel, total_rows=rows, tile_rows=tile_rows),
        out_shape=jax.ShapeDtypeStruct((rows, 2), jnp.float32),
        grid_spec=pltpu.PrefetchScalarGridSpec(
            num_scalar_prefetch=0,
            grid=grid,
            in_specs=[pl.BlockSpec((tile_rows, lanes), lambda i: (i, 0))],
            out_specs=pl.BlockSpec((tile_rows, 2), lambda i: (i, 0)),
        ),
        compiler_params=cparams,
    )(x2d)

    # ---- tiny (N, C)-sized parameter math in plain JAX ----
    count = n * h * w
    sums = stats[:, 0].reshape(n, c).sum(axis=0)
    sqs = stats[:, 1].reshape(n, c).sum(axis=0)
    mean = sums / count
    var = jnp.maximum(sqs / count - mean * mean, 0.0)       # biased var, clamped
    inv_std = jax.lax.rsqrt(var + eps)
    scale_c = gamma.astype(jnp.float32) * inv_std           # (C,)
    shift_c = beta.astype(jnp.float32) - mean * scale_c     # (C,)
    scale_r = jnp.tile(scale_c, (n,)).reshape(rows, 1)      # per-(n,c) row
    shift_r = jnp.tile(shift_c, (n,)).reshape(rows, 1)

    # ---- pass 2: fused normalize + ReLU ----
    y2d = pl.pallas_call(
        _bn_relu_kernel,
        out_shape=jax.ShapeDtypeStruct((rows, lanes), jnp.float32),
        grid_spec=pltpu.PrefetchScalarGridSpec(
            num_scalar_prefetch=0,
            grid=grid,
            in_specs=[
                pl.BlockSpec((tile_rows, lanes), lambda i: (i, 0)),
                pl.BlockSpec((tile_rows, 1), lambda i: (i, 0)),
                pl.BlockSpec((tile_rows, 1), lambda i: (i, 0)),
            ],
            out_specs=pl.BlockSpec((tile_rows, lanes), lambda i: (i, 0)),
        ),
        compiler_params=cparams,
    )(x2d, scale_r, shift_r)

    return y2d.reshape(n, c, h, w)                          # view, no copy


def _reference(x_nchw, gamma, beta):
    x = x_nchw.astype(jnp.float32)
    mean = jnp.mean(x, axis=(0, 2, 3), keepdims=True)
    var = jnp.mean((x - mean) ** 2, axis=(0, 2, 3), keepdims=True)
    y = (x - mean) * jax.lax.rsqrt(var + EPS)
    y = y * gamma.reshape(1, -1, 1, 1) + beta.reshape(1, -1, 1, 1)
    return jnp.maximum(y, 0.0)


if __name__ == "__main__":
    key = jax.random.PRNGKey(0)
    N, C, H, W = 2, 4, 16, 16
    x = jax.random.normal(key, (N, C, H, W), dtype=jnp.float32)

    # nn.BatchNorm2d default affine init: weight = 1, bias = 0.
    gamma = jnp.ones((C,), jnp.float32)
    beta = jnp.zeros((C,), jnp.float32)

    out = batchnorm_relu(x, gamma, beta)
    out = jax.block_until_ready(out)

    ref = _reference(x, gamma, beta)
    assert out.shape == (N, C, H, W)
    assert jnp.allclose(out, ref, atol=1e-4, rtol=1e-4)

    print("KERNEL_OK")
</pallas_src>

<mosaic_0001>
module attributes {stable_mosaic.version = 11 : i64} {
  func.func @_stats_kernel(%arg0: i32, %arg1: memref<8x256xf32, #tpu.memory_space<vmem>>, %arg2: memref<8x2xf32, #tpu.memory_space<vmem>>) attributes {dimension_semantics = [#tpu.dimension_semantics<parallel>], iteration_bounds = array<i64: 1>, scalar_prefetch = 0 : i64, scratch_operands = 0 : i64, tpu.core_type = #tpu.core_type<tc>, window_params = [{transform_indices = @transform_0, window_bounds = array<i64: 8, 256>}, {transform_indices = @transform_1, window_bounds = array<i64: 8, 2>}]} {
    %c0 = arith.constant 0 : index
    %c0_0 = arith.constant 0 : index
    %0 = vector.load %arg1[%c0, %c0_0] : memref<8x256xf32, #tpu.memory_space<vmem>>, vector<8x256xf32>
    %cst = arith.constant dense<0.000000e+00> : vector<8xf32>
    %1 = vector.multi_reduction <add>, %0, %cst [1] : vector<8x256xf32> to vector<8xf32>
    %2 = vector.shape_cast %1 : vector<8xf32> to vector<8x1xf32>
    %3 = arith.mulf %0, %0 : vector<8x256xf32>
    %cst_1 = arith.constant dense<0.000000e+00> : vector<8xf32>
    %4 = vector.multi_reduction <add>, %3, %cst_1 [1] : vector<8x256xf32> to vector<8xf32>
    %5 = vector.shape_cast %4 : vector<8xf32> to vector<8x1xf32>
    %6 = tpu.concatenate %2, %5 in 1 : vector<8x1xf32>, vector<8x1xf32> -> vector<8x2xf32>
    %c0_2 = arith.constant 0 : index
    %c0_3 = arith.constant 0 : index
    %7 = vector.load %arg2[%c0_2, %c0_3] : memref<8x2xf32, #tpu.memory_space<vmem>>, vector<8x2xf32>
    tpu.vector_store %arg2[%c0_2, %c0_3], %6 {strides = array<i32>} : memref<8x2xf32, #tpu.memory_space<vmem>>, vector<8x2xf32>,
    return
  }
  func.func @transform_0(%arg0: i32) -> (i32, i32) {
    %c0_i32 = arith.constant 0 : i32
    %c0_i32_0 = arith.constant 0 : i32
    return %arg0, %c0_i32 : i32, i32
  }
  func.func @transform_1(%arg0: i32) -> (i32, i32) {
    %c0_i32 = arith.constant 0 : i32
    %c0_i32_0 = arith.constant 0 : i32
    return %arg0, %c0_i32 : i32, i32
  }
}

</mosaic_0001>

<llo_original>
// kernel: tpu_custom_call.1
$region0: #{tpu_custom_call.1}
  #allocation0 [shape = 'u32[]', space=smem, size = 0x4, offset = 0x4, fixed_abs, tag = 'smem constant byte address 0x4 - core index']
  #allocation1 [shape = 'u32[144,128]{1,0:T(1,128)}', space=vmem, size = 0x12000, scoped, tag = 'internal scratch']
  %s0 = inlined_call_operand.hbm [shape: f32[8,256], index: 0, kind: input, shape index: {}]
  %s1 = inlined_call_operand.vmem [shape: f32[8,2], index: 1, kind: output, shape index: {}]
  %s2 = sld [smem:[#allocation0]]
  $region18: #{tpu_custom_call.1} parent=0
    _
  %s4 = ssub.s32 1, %s2
  %s5 = scalar_select 0, %s4, %s2
  $region1: #{tpu_custom_call.1} parent=0
    #allocation2 [shape = 'u8[8192]{0}', space=vmem, size = 0x2000, scoped, tag = 'input window, operand 0, single buffered']
    #allocation3 [shape = 's32[1]{0}', space=sflag, size = 0x4, scoped, tag = 'scoped memory for tpu_custom_call.1']
    %6 = vsyncpa [#allocation3], 0
    // Predicated region
    $region2: #{tpu_custom_call.1} parent=1 // pred_check
      _
    $region3: #{tpu_custom_call.1} parent=1 // pred_check_branch
      %8 = sbr.rel (0) target = $region5
    $region4: #{tpu_custom_call.1} parent=1 // pred_region
      %s10 = ssub.s32 256, 256
      %11 = vsyncadd [#allocation3], %s10
      %s13 = sshll.u32 [#allocation2], 4
      %s14 = int_to_ptr.vmem [resolvable:$true] %s13
      %16 = dma.hbm_to_vmem [thread:$0]  %s0, 256, %s14, [#allocation3]
    $region5: #{tpu_custom_call.1} parent=1 // pred_fallthru
      _
    // Predicated region
    $region6: #{tpu_custom_call.1} parent=1 // pred_check
      _
    $region7: #{tpu_custom_call.1} parent=1 // pred_check_branch
      %18 = sbr.rel (0) target = $region9
    $region8: #{tpu_custom_call.1} parent=1 // pred_region
      %19 = dma.done [#allocation3], 256
    $region9: #{tpu_custom_call.1} parent=1 // pred_fallthru
      _
    %v20 = vld [vmem:[#allocation2] sm:$0xff]
    %v21 = vld [vmem:[#allocation2 + $0x8] sm:$0xff]
    %v22 = vadd.f32 %v20, %v21
    %23 = vadd.xlane.f32.xlu0 %v22
    %v24 = vpop.xlane.xlu0 %23
    %v25 = vmul.f32 %v20, %v20
    %v26 = vmul.f32 %v21, %v21
    %v27 = vadd.f32 %v25, %v26
    %28 = vadd.xlane.f32.xlu0 %v27
    %v29 = vpop.xlane.xlu0 %28
    %vm30 = vcmask 7168
    %v31 = vsel %vm30, %v24, %v29
    %vm32 = vcmask 15360
    %33 = vst.msk [vmem:[%s1] sm:$0xff] %vm32, %v31
    // Predicated region
    $region10: #{tpu_custom_call.1} parent=1 // pred_check
      _
    $region11: #{tpu_custom_call.1} parent=1 // pred_check_branch
      %35 = sbr.rel (0) target = $region13
    $region12: #{tpu_custom_call.1} parent=1 // pred_region
      _
    $region13: #{tpu_custom_call.1} parent=1 // pred_fallthru
      _
    // Predicated region
    $region14: #{tpu_custom_call.1} parent=1 // pred_check
      _
    $region15: #{tpu_custom_call.1} parent=1 // pred_check_branch
      %37 = sbr.rel (0) target = $region17
    $region16: #{tpu_custom_call.1} parent=1 // pred_region
      _
    $region17: #{tpu_custom_call.1} parent=1 // pred_fallthru
      _
    %38 = vsyncpa [#allocation3], 1

</llo_original>
